<compile_context>
chip_gen: v7x
topology: tpu7x:2x2x1
jax: 0.10.0
libtpu: 0.0.40
codegen_flags: <defaults>
</compile_context>

<pallas_src>
import functools

import jax
import jax.numpy as jnp
from jax import lax
from jax.experimental import pallas as pl
from jax.experimental.pallas import tpu as pltpu


# ----------------------------------------------------------------------------
# Fused kernel: (W-folded) embedding sum -> bias -> LayerNorm(H)
# ----------------------------------------------------------------------------
def bert_embedding_kernel(ids_ref, wtab_ref, pos_ref, vec_ref, out_ref, *, eps):
    # Static shapes per grid step:
    #   ids_ref  (TN, 2)  int32, TN = TB * L   [col 0 = word id, col 1 = token type]
    #   wtab_ref (V,  H)  f32   word_table @ W          (W-folded)
    #   pos_ref  (L,  H)  f32   pos_table  @ W          (W-folded)
    #   vec_ref  (4,  H)  f32   rows: [bias + tt0@W, (tt1 - tt0)@W, gamma, beta]
    #   out_ref  (TB, L, H) f32
    tb, l, h = out_ref.shape
    n = tb * l
    v = wtab_ref.shape[0]

    ids = ids_ref[...]                                      # (N, 2) int32
    wid = ids[:, 0:1]                                       # (N, 1)
    tt = ids[:, 1:2].astype(jnp.float32)                    # (N, 1) in {0, 1}

    vec = vec_ref[...]                                      # (4, H)
    base = vec[0:1, :]                                      # bias + token-type row 0
    delta = vec[1:2, :]                                     # token-type (row1 - row0)
    gamma = vec[2:3, :]
    beta = vec[3:4, :]

    # --- word-embedding gather as one-hot matmul on the fused (V, H) table ---
    # (vocab is tiny; for a real vocab use a scalar-prefetch / Element gather)
    vocab_iota = lax.broadcasted_iota(jnp.int32, (n, v), 1)  # (N, V)
    onehot = (vocab_iota == wid).astype(jnp.float32)         # (N, V)
    we = jnp.dot(onehot, wtab_ref[...],
                 preferred_element_type=jnp.float32)         # (N, H)

    # --- token-type blend + bias (all lane-dense, width H) -------------------
    x2 = we + base + tt * delta                              # (N, H)

    # --- positional embedding: broadcast over the batch dim (no concat) ------
    x = x2.reshape(tb, l, h) + pos_ref[...][None, :, :]      # (TB, L, H)

    # --- one-pass LayerNorm(H): var = E[x^2] - mean^2 -------------------------
    inv_h = jnp.float32(1.0 / h)
    mean = jnp.sum(x, axis=-1, keepdims=True) * inv_h
    ex2 = jnp.sum(x * x, axis=-1, keepdims=True) * inv_h
    var = ex2 - mean * mean
    normed = (x - mean) * lax.rsqrt(var + eps)
    out_ref[...] = normed * gamma[None, :, :] + beta[None, :, :]


def bert_embedding_forward(params, word_id, token_type, *, eps=1e-5,
                           rows_per_tile=1024):
    """word_id / token_type: int32 (B, L) with L == max_len. Returns (B, L, H)."""
    B, L = word_id.shape
    word_tab = params["word_embedding"]          # (V, 50)
    pos_tab = params["pos_embedding"]            # (L, 50)
    tt_tab = params["token_type_embedding"]      # (2, 50)
    w, b = params["w_l"], params["b_l"]          # (50, H), (1, H)
    gamma, beta = params["ln_gamma"], params["ln_beta"]  # (1, H)
    H = w.shape[1]
    V = word_tab.shape[0]
    N = B * L

    # ---- Fold the Linear weight into the embedding tables (lane-dense at H) --
    hp = lax.Precision.HIGHEST
    wtab_f = jnp.dot(word_tab, w, precision=hp)              # (V, H)
    pos_f = jnp.dot(pos_tab, w, precision=hp)                # (L, H)
    tt_f = jnp.dot(tt_tab, w, precision=hp)                  # (2, H)
    base = b + tt_f[0:1, :]                                  # (1, H)
    delta = tt_f[1:2, :] - tt_f[0:1, :]                      # (1, H)
    vec = jnp.concatenate([base, delta, gamma, beta], axis=0)  # (4, H)

    # ---- Pack the two id tensors into one (N, 2) int32 array -----------------
    ids = jnp.stack([word_id.astype(jnp.int32), token_type.astype(jnp.int32)],
                    axis=-1).reshape(N, 2)

    # ---- Tile the grid over the batch: TB sequences (TB*L rows) per step -----
    tb = max(1, min(B, rows_per_tile // max(L, 1)))
    while B % tb:
        tb -= 1
    tn = tb * L
    grid = (B // tb,)

    cost = pl.CostEstimate(
        flops=2 * N * V * H + 10 * N * H,
        transcendentals=N,
        bytes_accessed=4 * (N * 2 + V * H + L * H + 4 * H + N * H),
    )

    grid_spec = pltpu.PrefetchScalarGridSpec(
        num_scalar_prefetch=0,
        grid=grid,
        in_specs=[
            pl.BlockSpec((tn, 2), lambda i: (i, 0)),          # packed ids
            pl.BlockSpec(wtab_f.shape, lambda i: (0, 0)),     # resident tables
            pl.BlockSpec(pos_f.shape, lambda i: (0, 0)),
            pl.BlockSpec(vec.shape, lambda i: (0, 0)),
        ],
        out_specs=pl.BlockSpec((tb, L, H), lambda i: (i, 0, 0)),
    )
    out = pl.pallas_call(
        functools.partial(bert_embedding_kernel, eps=eps),
        out_shape=jax.ShapeDtypeStruct((B, L, H), jnp.float32),
        grid_spec=grid_spec,
        cost_estimate=cost,
        compiler_params=pltpu.CompilerParams(
            dimension_semantics=("parallel",),
            vmem_limit_bytes=32 * 1024 * 1024),
    )(ids, wtab_f, pos_f, vec)
    return out


# ----------------------------------------------------------------------------
# Pure-JAX reference (for a correctness sanity check).
# ----------------------------------------------------------------------------
def bert_embedding_reference(params, word_id, token_type, *, eps=1e-5):
    we = jnp.take(params["word_embedding"], word_id, axis=0)            # (B,L,50)
    pe = params["pos_embedding"][None, :, :]                            # (1,L,50)
    te = jnp.take(params["token_type_embedding"], token_type, axis=0)   # (B,L,50)
    x = we + pe + te
    h = jnp.einsum("bld,dh->blh", x, params["w_l"],
                   precision=lax.Precision.HIGHEST) + params["b_l"][0]
    mean = jnp.mean(h, axis=-1, keepdims=True)
    var = jnp.mean((h - mean) ** 2, axis=-1, keepdims=True)
    hn = (h - mean) / jnp.sqrt(var + eps)
    return hn * params["ln_gamma"][0] + params["ln_beta"][0]


# ----------------------------------------------------------------------------
# Deterministic parameter init (shapes from the PyTorch __init__).
# ----------------------------------------------------------------------------
def init_params(key, vect_len, max_len, hidden_size, emb_dim=50):
    vocab = vect_len + 4
    ks = jax.random.split(key, 5)
    s_lin = 1.0 / jnp.sqrt(jnp.float32(emb_dim))
    return {
        "word_embedding": jax.random.normal(ks[0], (vocab, emb_dim), jnp.float32),
        "pos_embedding": jax.random.normal(ks[1], (max_len, emb_dim), jnp.float32),
        "token_type_embedding": jax.random.normal(ks[2], (2, emb_dim), jnp.float32),
        # Linear(50 -> hidden): stored transposed (in, out); torch-style uniform init.
        "w_l": jax.random.uniform(ks[3], (emb_dim, hidden_size), jnp.float32,
                                  -s_lin, s_lin),
        "b_l": jax.random.uniform(ks[4], (1, hidden_size), jnp.float32,
                                  -s_lin, s_lin),
        "ln_gamma": jnp.ones((1, hidden_size), jnp.float32),
        "ln_beta": jnp.zeros((1, hidden_size), jnp.float32),
    }


def make_token_type(s1_len, s2_len, maxlen):
    """JAX port of the token_type() helper: 1s over the second-sentence span."""
    rows = []
    for a, b in zip(s1_len, s2_len):
        idx = jnp.arange(maxlen)
        rows.append(((idx >= 2 + a) & (idx < 3 + a + b)).astype(jnp.int32))
    return jnp.stack(rows, axis=0)


if __name__ == "__main__":
    key = jax.random.PRNGKey(0)
    k_par, k_ids = jax.random.split(key, 2)

    B, max_len = 4, 16
    vect_len = 20
    vocab = vect_len + 4
    hidden_size = 128          # lane-dense output width

    params = init_params(k_par, vect_len, max_len, hidden_size)

    word_id = jax.random.randint(k_ids, (B, max_len), 0, vocab, dtype=jnp.int32)
    token_type = make_token_type([5, 6, 3, 7], [4, 3, 6, 2], max_len)   # (B, max_len)

    # rows_per_tile=32 -> 2 sequences per grid step -> grid=(2,) (exercises the
    # pipelined / "parallel" path even at this toy size).
    out = bert_embedding_forward(params, word_id, token_type, rows_per_tile=32)
    out = jax.block_until_ready(out)

    assert out.shape == (B, max_len, hidden_size) and out.dtype == jnp.float32
    assert bool(jnp.all(jnp.isfinite(out)))

    ref = bert_embedding_reference(params, word_id, token_type)
    assert bool(jnp.allclose(out, ref, atol=1e-2, rtol=1e-2))

    print("KERNEL_OK")
</pallas_src>

<mosaic_0001>
module attributes {stable_mosaic.version = 11 : i64} {
  func.func @bert_embedding_kernel(%arg0: i32, %arg1: memref<32x2xi32, #tpu.memory_space<vmem>>, %arg2: memref<24x128xf32, #tpu.memory_space<vmem>>, %arg3: memref<16x128xf32, #tpu.memory_space<vmem>>, %arg4: memref<4x128xf32, #tpu.memory_space<vmem>>, %arg5: memref<2x16x128xf32, #tpu.memory_space<vmem>>) attributes {dimension_semantics = [#tpu.dimension_semantics<parallel>], iteration_bounds = array<i64: 2>, scalar_prefetch = 0 : i64, scratch_operands = 0 : i64, tpu.core_type = #tpu.core_type<tc>, window_params = [{transform_indices = @transform_0, window_bounds = array<i64: 32, 2>}, {pipeline_mode = #tpu.pipeline_mode<synchronous>, transform_indices = @transform_1, window_bounds = array<i64: 24, 128>}, {pipeline_mode = #tpu.pipeline_mode<synchronous>, transform_indices = @transform_2, window_bounds = array<i64: 16, 128>}, {pipeline_mode = #tpu.pipeline_mode<synchronous>, transform_indices = @transform_3, window_bounds = array<i64: 4, 128>}, {transform_indices = @transform_4, window_bounds = array<i64: 2, 16, 128>}]} {
    %c0 = arith.constant 0 : index
    %c0_0 = arith.constant 0 : index
    %0 = vector.load %arg1[%c0, %c0_0] : memref<32x2xi32, #tpu.memory_space<vmem>>, vector<32x2xi32>
    %1 = vector.extract_strided_slice %0 {offsets = [0, 0], sizes = [32, 1], strides = [1, 1]} : vector<32x2xi32> to vector<32x1xi32>
    %2 = vector.extract_strided_slice %0 {offsets = [0, 1], sizes = [32, 1], strides = [1, 1]} : vector<32x2xi32> to vector<32x1xi32>
    %3 = arith.sitofp %2 : vector<32x1xi32> to vector<32x1xf32>
    %c0_1 = arith.constant 0 : index
    %c0_2 = arith.constant 0 : index
    %4 = vector.load %arg4[%c0_1, %c0_2] : memref<4x128xf32, #tpu.memory_space<vmem>>, vector<4x128xf32>
    %5 = vector.extract_strided_slice %4 {offsets = [0, 0], sizes = [1, 128], strides = [1, 1]} : vector<4x128xf32> to vector<1x128xf32>
    %6 = vector.extract_strided_slice %4 {offsets = [1, 0], sizes = [1, 128], strides = [1, 1]} : vector<4x128xf32> to vector<1x128xf32>
    %7 = vector.extract_strided_slice %4 {offsets = [2, 0], sizes = [1, 128], strides = [1, 1]} : vector<4x128xf32> to vector<1x128xf32>
    %8 = vector.extract_strided_slice %4 {offsets = [3, 0], sizes = [1, 128], strides = [1, 1]} : vector<4x128xf32> to vector<1x128xf32>
    %9 = tpu.iota {dimensions = array<i32: 1>} : vector<32x24xi32>
    %10 = vector.broadcast %1 : vector<32x1xi32> to vector<32x24xi32>
    %11 = arith.cmpi eq, %9, %10 : vector<32x24xi32>
    %12 = arith.extui %11 : vector<32x24xi1> to vector<32x24xi32>
    %13 = arith.sitofp %12 : vector<32x24xi32> to vector<32x24xf32>
    %c0_3 = arith.constant 0 : index
    %c0_4 = arith.constant 0 : index
    %14 = vector.load %arg2[%c0_3, %c0_4] : memref<24x128xf32, #tpu.memory_space<vmem>>, vector<24x128xf32>
    %cst = arith.constant dense<0.000000e+00> : vector<32x128xf32>
    %15 = tpu.matmul %13, %14, %cst {dimension_numbers = #tpu.dot_dimension_numbers<[1], [0], [0], [1], [0, 0, 1, 1], [], []>} : vector<32x24xf32>, vector<24x128xf32>, vector<32x128xf32> -> vector<32x128xf32>
    %16 = vector.broadcast %5 : vector<1x128xf32> to vector<32x128xf32>
    %17 = arith.addf %15, %16 : vector<32x128xf32>
    %18 = vector.broadcast %3 : vector<32x1xf32> to vector<32x128xf32>
    %19 = vector.broadcast %6 : vector<1x128xf32> to vector<32x128xf32>
    %20 = arith.mulf %18, %19 : vector<32x128xf32>
    %21 = arith.addf %17, %20 : vector<32x128xf32>
    %22 = vector.shape_cast %21 : vector<32x128xf32> to vector<2x16x128xf32>
    %c0_5 = arith.constant 0 : index
    %c0_6 = arith.constant 0 : index
    %23 = vector.load %arg3[%c0_5, %c0_6] : memref<16x128xf32, #tpu.memory_space<vmem>>, vector<16x128xf32>
    %24 = vector.shape_cast %23 : vector<16x128xf32> to vector<1x16x128xf32>
    %25 = vector.broadcast %24 : vector<1x16x128xf32> to vector<2x16x128xf32>
    %26 = arith.addf %22, %25 : vector<2x16x128xf32>
    %cst_7 = arith.constant dense<0.000000e+00> : vector<2x16xf32>
    %27 = vector.multi_reduction <add>, %26, %cst_7 [2] : vector<2x16x128xf32> to vector<2x16xf32>
    %28 = vector.shape_cast %27 : vector<2x16xf32> to vector<2x16x1xf32>
    %cst_8 = arith.constant 7.812500e-03 : f32
    %29 = vector.broadcast %cst_8 : f32 to vector<2x16x1xf32>
    %30 = arith.mulf %28, %29 : vector<2x16x1xf32>
    %31 = arith.mulf %26, %26 : vector<2x16x128xf32>
    %cst_9 = arith.constant dense<0.000000e+00> : vector<2x16xf32>
    %32 = vector.multi_reduction <add>, %31, %cst_9 [2] : vector<2x16x128xf32> to vector<2x16xf32>
    %33 = vector.shape_cast %32 : vector<2x16xf32> to vector<2x16x1xf32>
    %cst_10 = arith.constant 7.812500e-03 : f32
    %34 = vector.broadcast %cst_10 : f32 to vector<2x16x1xf32>
    %35 = arith.mulf %33, %34 : vector<2x16x1xf32>
    %36 = arith.mulf %30, %30 : vector<2x16x1xf32>
    %37 = arith.subf %35, %36 : vector<2x16x1xf32>
    %38 = vector.broadcast %30 : vector<2x16x1xf32> to vector<2x16x128xf32>
    %39 = arith.subf %26, %38 : vector<2x16x128xf32>
    %cst_11 = arith.constant 9.99999974E-6 : f32
    %40 = vector.broadcast %cst_11 : f32 to vector<2x16x1xf32>
    %41 = arith.addf %37, %40 : vector<2x16x1xf32>
    %42 = math.rsqrt %41 : vector<2x16x1xf32>
    %43 = vector.broadcast %42 : vector<2x16x1xf32> to vector<2x16x128xf32>
    %44 = arith.mulf %39, %43 : vector<2x16x128xf32>
    %45 = vector.shape_cast %7 : vector<1x128xf32> to vector<1x1x128xf32>
    %46 = vector.broadcast %45 : vector<1x1x128xf32> to vector<2x16x128xf32>
    %47 = arith.mulf %44, %46 : vector<2x16x128xf32>
    %48 = vector.shape_cast %8 : vector<1x128xf32> to vector<1x1x128xf32>
    %49 = vector.broadcast %48 : vector<1x1x128xf32> to vector<2x16x128xf32>
    %50 = arith.addf %47, %49 : vector<2x16x128xf32>
    %c0_12 = arith.constant 0 : index
    %c0_13 = arith.constant 0 : index
    %c0_14 = arith.constant 0 : index
    %51 = vector.load %arg5[%c0_12, %c0_13, %c0_14] : memref<2x16x128xf32, #tpu.memory_space<vmem>>, vector<2x16x128xf32>
    tpu.vector_store %arg5[%c0_12, %c0_13, %c0_14], %50 {strides = array<i32>} : memref<2x16x128xf32, #tpu.memory_space<vmem>>, vector<2x16x128xf32>,
    return
  }
  func.func @transform_0(%arg0: i32) -> (i32, i32) {
    %c0_i32 = arith.constant 0 : i32
    %c0_i32_0 = arith.constant 0 : i32
    return %arg0, %c0_i32 : i32, i32
  }
  func.func @transform_1(%arg0: i32) -> (i32, i32) {
    %c0_i32 = arith.constant 0 : i32
    %c0_i32_0 = arith.constant 0 : i32
    %c0_i32_1 = arith.constant 0 : i32
    return %c0_i32, %c0_i32_0 : i32, i32
  }
  func.func @transform_2(%arg0: i32) -> (i32, i32) {
    %c0_i32 = arith.constant 0 : i32
    %c0_i32_0 = arith.constant 0 : i32
    %c0_i32_1 = arith.constant 0 : i32
    return %c0_i32, %c0_i32_0 : i32, i32
  }
  func.func @transform_3(%arg0: i32) -> (i32, i32) {
    %c0_i32 = arith.constant 0 : i32
    %c0_i32_0 = arith.constant 0 : i32
    %c0_i32_1 = arith.constant 0 : i32
    return %c0_i32, %c0_i32_0 : i32, i32
  }
  func.func @transform_4(%arg0: i32) -> (i32, i32, i32) {
    %c0_i32 = arith.constant 0 : i32
    %c0_i32_0 = arith.constant 0 : i32
    %c0_i32_1 = arith.constant 0 : i32
    return %arg0, %c0_i32, %c0_i32_0 : i32, i32, i32
  }
}

</mosaic_0001>

<llo_original>
// kernel: tpu_custom_call.1
$region0: #{tpu_custom_call.1}
  #allocation0 [shape = 'u32[]', space=smem, size = 0x4, offset = 0x4, fixed_abs, tag = 'smem constant byte address 0x4 - core index']
  #allocation1 [shape = 'u32[144,128]{1,0:T(1,128)}', space=vmem, size = 0x12000, scoped, tag = 'internal scratch']
  %s0 = inlined_call_operand.vmem [shape: s32[64,2], index: 0, kind: input, shape index: {}]
  %s1 = inlined_call_operand.vmem [shape: f32[24,128], index: 1, kind: input, shape index: {}]
  %s2 = inlined_call_operand.vmem [shape: f32[16,128], index: 2, kind: input, shape index: {}]
  %s3 = inlined_call_operand.vmem [shape: f32[4,128], index: 3, kind: input, shape index: {}]
  %s4 = inlined_call_operand.hbm [shape: f32[4,16,128], index: 4, kind: output, shape index: {}]
  %s5 = sld [smem:[#allocation0]]
  $region49: #{tpu_custom_call.1} parent=0
    _
  %s7 = ssub.s32 1, %s5
  %s8 = scalar_select 0, %s7, %s5
  $region1: #{tpu_custom_call.1} parent=0
    #allocation2 [shape = 'u8[32768]{0}', space=vmem, size = 0x8000, scoped, tag = 'output window, operand 0']
    #allocation3 [shape = 's32[2]{0}', space=sflag, size = 0x8, scoped, tag = 'scoped memory for tpu_custom_call.1']
    %9 = vsyncpa [#allocation3], 0
    %s10 = scalar_lea.sflag [#allocation3], 1
    %11 = vsyncpa %s10, 0
    loop: start=0, step=1, limit=4
    $region2: #{tpu_custom_call.1} parent=1 // loop_pre_header
      _
    $region3: #{tpu_custom_call.1} parent=1 // loop_header
      %s13 = sphi 0, %s17
      %p14 = scmp.ge.s32.totalorder %s13, 4
      %s23 = sphi 0, %s25
      %s26 = sphi 0, %s23
      %s27 = sphi 0, %s26
      %s43 = sphi 0, %s27
      %s47 = sphi 0, %s47
      %s49 = sphi 0, %s47
      %s50 = sphi 0, %s49
      %s64 = sphi 0, %s50
      %s68 = sphi 0, %s68
      %s70 = sphi 0, %s68
      %s71 = sphi 0, %s70
      %s85 = sphi 0, %s71
      %s89 = sphi 0, %s89
      %s91 = sphi 0, %s89
      %s92 = sphi 0, %s91
      %s106 = sphi 0, %s92
      %s112 = sphi 0, %s114
      %s115 = sphi 0, %s112
      %s116 = sphi 0, %s115
      %s132 = sphi 0, %s116
    $region4: #{tpu_custom_call.1} parent=1 // loop_header_branch
      %16 = sbr.rel (%p14) target = $region8
    $region5: #{tpu_custom_call.1} parent=1 // loop_body
      %s18 = ssub.s32 %s13, 1
      %s19 = ssub.s32 %s13, 2
      %s20 = sadd.s32 %s13, 1
      %s21 = ssub.s32 %s13, %s20
      %p22 = scmp.eq.s32.totalorder %s21, 0
      %s24 = sadd.s32 %s23, 1
      %s25 = scalar_select %p22, %s23, %s24
      %p28 = pneg %p22
      %p29 = scmp.eq.s32.totalorder %s13, 1
      %p30 = por %p28, %p29
      %p31 = scmp.ne.s32.totalorder %s23, %s26
      %p32 = scmp.eq.s32.totalorder %s13, 0
      %p33 = por %p31, %p32
      %p34 = scmp.ne.s32.totalorder %s23, %s26
      %p35 = scmp.eq.s32.totalorder %s18, 1
      %p36 = por %p34, %p35
      %p37 = scmp.ne.s32.totalorder %s26, %s27
      %p38 = scmp.eq.s32.totalorder %s18, 0
      %p39 = por %p37, %p38
      %p40 = scmp.ne.s32.totalorder %s26, %s27
      %p41 = scmp.eq.s32.totalorder %s19, 1
      %p42 = por %p40, %p41
      %p44 = scmp.ne.s32.totalorder %s27, %s43
      %p45 = scmp.eq.s32.totalorder %s19, 0
      %p46 = por %p44, %p45
      %s48 = sadd.s32 %s47, 1
      %p51 = scmp.eq.s32.totalorder %s13, 1
      %p52 = scmp.ne.s32.totalorder %s47, %s49
      %p53 = scmp.eq.s32.totalorder %s13, 0
      %p54 = por %p52, %p53
      %p55 = scmp.ne.s32.totalorder %s47, %s49
      %p56 = scmp.eq.s32.totalorder %s18, 1
      %p57 = por %p55, %p56
      %p58 = scmp.ne.s32.totalorder %s49, %s50
      %p59 = scmp.eq.s32.totalorder %s18, 0
      %p60 = por %p58, %p59
      %p61 = scmp.ne.s32.totalorder %s49, %s50
      %p62 = scmp.eq.s32.totalorder %s19, 1
      %p63 = por %p61, %p62
      %p65 = scmp.ne.s32.totalorder %s50, %s64
      %p66 = scmp.eq.s32.totalorder %s19, 0
      %p67 = por %p65, %p66
      %s69 = sadd.s32 %s68, 1
      %p72 = scmp.eq.s32.totalorder %s13, 1
      %p73 = scmp.ne.s32.totalorder %s68, %s70
      %p74 = scmp.eq.s32.totalorder %s13, 0
      %p75 = por %p73, %p74
      %p76 = scmp.ne.s32.totalorder %s68, %s70
      %p77 = scmp.eq.s32.totalorder %s18, 1
      %p78 = por %p76, %p77
      %p79 = scmp.ne.s32.totalorder %s70, %s71
      %p80 = scmp.eq.s32.totalorder %s18, 0
      %p81 = por %p79, %p80
      %p82 = scmp.ne.s32.totalorder %s70, %s71
      %p83 = scmp.eq.s32.totalorder %s19, 1
      %p84 = por %p82, %p83
      %p86 = scmp.ne.s32.totalorder %s71, %s85
      %p87 = scmp.eq.s32.totalorder %s19, 0
      %p88 = por %p86, %p87
      %s90 = sadd.s32 %s89, 1
      %p93 = scmp.eq.s32.totalorder %s13, 1
      %p94 = scmp.ne.s32.totalorder %s89, %s91
      %p95 = scmp.eq.s32.totalorder %s13, 0
      %p96 = por %p94, %p95
      %p97 = scmp.ne.s32.totalorder %s89, %s91
      %p98 = scmp.eq.s32.totalorder %s18, 1
      %p99 = por %p97, %p98
      %p100 = scmp.ne.s32.totalorder %s91, %s92
      %p101 = scmp.eq.s32.totalorder %s18, 0
      %p102 = por %p100, %p101
      %p103 = scmp.ne.s32.totalorder %s91, %s92
      %p104 = scmp.eq.s32.totalorder %s19, 1
      %p105 = por %p103, %p104
      %p107 = scmp.ne.s32.totalorder %s92, %s106
      %p108 = scmp.eq.s32.totalorder %s19, 0
      %p109 = por %p107, %p108
      %s110 = ssub.s32 %s13, %s20
      %p111 = scmp.eq.s32.totalorder %s110, 0
      %s113 = sadd.s32 %s112, 1
      %s114 = scalar_select %p111, %s112, %s113
      %p117 = pneg %p111
      %p118 = scmp.eq.s32.totalorder %s13, 1
      %p119 = por %p117, %p118
      %p120 = scmp.ne.s32.totalorder %s112, %s115
      %p121 = scmp.eq.s32.totalorder %s13, 0
      %p122 = por %p120, %p121
      %p123 = scmp.ne.s32.totalorder %s112, %s115
      %p124 = scmp.eq.s32.totalorder %s18, 1
      %p125 = por %p123, %p124
      %p126 = scmp.ne.s32.totalorder %s115, %s116
      %p127 = scmp.eq.s32.totalorder %s18, 0
      %p128 = por %p126, %p127
      %p129 = scmp.ne.s32.totalorder %s115, %s116
      %p130 = scmp.eq.s32.totalorder %s19, 1
      %p131 = por %p129, %p130
      %p133 = scmp.ne.s32.totalorder %s116, %s132
      %p134 = scmp.eq.s32.totalorder %s19, 0
      %p135 = por %p133, %p134
      %p136 = scmp.le.s32.totalorder 1, %s13
      %p137 = scmp.lt.s32.totalorder %s13, 3
      %p138 = pnand %p136, %p137
      %p139 = pneg %p138
      // Predicated region
      $region9: #{tpu_custom_call.1} parent=5 // pred_check
        _
      $region10: #{tpu_custom_call.1} parent=5 // pred_check_branch
        %141 = sbr.rel (%p138) target = $region12
      $region11: #{tpu_custom_call.1} parent=5 // pred_region
        %s142 = ssub.s32 %s13, 1
        // Predicated region
        $region13: #{tpu_custom_call.1} parent=11 // pred_check
          %p143 = pneg %p60
        $region14: #{tpu_custom_call.1} parent=11 // pred_check_branch
          %145 = sbr.rel (%p143) target = $region16
        $region15: #{tpu_custom_call.1} parent=11 // pred_region
          _
        $region16: #{tpu_custom_call.1} parent=11 // pred_fallthru
          _
        // Predicated region
        $region17: #{tpu_custom_call.1} parent=11 // pred_check
          %p146 = pneg %p81
        $region18: #{tpu_custom_call.1} parent=11 // pred_check_branch
          %148 = sbr.rel (%p146) target = $region20
        $region19: #{tpu_custom_call.1} parent=11 // pred_region
          _
        $region20: #{tpu_custom_call.1} parent=11 // pred_fallthru
          _
        // Predicated region
        $region21: #{tpu_custom_call.1} parent=11 // pred_check
          %p149 = pneg %p102
        $region22: #{tpu_custom_call.1} parent=11 // pred_check_branch
          %151 = sbr.rel (%p149) target = $region24
        $region23: #{tpu_custom_call.1} parent=11 // pred_region
          _
        $region24: #{tpu_custom_call.1} parent=11 // pred_fallthru
          _
      $region12: #{tpu_custom_call.1} parent=5 // pred_fallthru
        _
      %p152 = scmp.lt.s32.totalorder %s13, 2
      // Predicated region
      $region25: #{tpu_custom_call.1} parent=5 // pred_check
        %p153 = pneg %p152
      $region26: #{tpu_custom_call.1} parent=5 // pred_check_branch
        %155 = sbr.rel (%p153) target = $region28
      $region27: #{tpu_custom_call.1} parent=5 // pred_region
        // Predicated region
        $region29: #{tpu_custom_call.1} parent=27 // pred_check
          %p156 = pneg %p33
        $region30: #{tpu_custom_call.1} parent=27 // pred_check_branch
          %158 = sbr.rel (%p156) target = $region32
        $region31: #{tpu_custom_call.1} parent=27 // pred_region
          %s159 = smul.u32 4, %s13
          %p160 = scmp.lt.s32.totalorder %s159, 7
          %s161 = scalar_select %p160, %s159, 7
          %s162 = smul.addr %s161, 8
          %s163 = scalar_lea.vmem %s0, %s162
          %s164 = smul.u32 4, %s13
        $region32: #{tpu_custom_call.1} parent=27 // pred_fallthru
          _
      $region28: #{tpu_custom_call.1} parent=5 // pred_fallthru
        _
      %p165 = scmp.le.s32.totalorder 1, %s13
      %p166 = scmp.lt.s32.totalorder %s13, 3
      %p167 = pnand %p165, %p166
      %p168 = pneg %p167
      // Predicated region
      $region33: #{tpu_custom_call.1} parent=5 // pred_check
        _
      $region34: #{tpu_custom_call.1} parent=5 // pred_check_branch
        %170 = sbr.rel (%p167) target = $region36
      $region35: #{tpu_custom_call.1} parent=5 // pred_region
        %s171 = ssub.s32 %s13, 1
        %s172 = smul.u32 4, %s18
        %p173 = scmp.lt.s32.totalorder %s172, 7
        %s174 = scalar_select %p173, %s172, 7
        %s175 = smul.addr %s174, 8
        %s176 = scalar_lea.vmem %s0, %s175
        %p177 = pneg %p39
        %p178 = pneg %p36
        %p179 = pneg %p60
        %p180 = pneg %p57
        %p181 = pneg %p81
        %p182 = pneg %p78
        %p183 = pneg %p102
        %p184 = pneg %p99
        %p185 = pneg %p128
        %p186 = pneg %p125
        %s187 = sand.u32 %s115, 1
        %s188 = scalar_lea.sflag [#allocation3], %s187
        %s189 = sand.u32 %s115, 1
        %s190 = smul.addr %s189, 32
        %s191 = scalar_lea.vmem [#allocation2], %s190
        %s192 = smul.u32 4, %s18
        %p193 = scmp.lt.s32.totalorder %s192, 7
        %s194 = scalar_select %p193, %s192, 7
        %s195 = smul.addr %s194, 8
        %s196 = scalar_lea.vmem %s0, %s195
        %s197 = smul.u32 4, %s18
        %s198 = smul.u32 2, %s18
        %v199 = vld [vmem:[%s196] sm:$0xff]
        %v200 = vld [vmem:[%s196 + $0x8] sm:$0xff]
        %v201 = vld [vmem:[%s196 + $0x10] sm:$0xff]
        %v202 = vld [vmem:[%s196 + $0x18] sm:$0xff]
        %v203 = vcvt.s32.f32 %v199
        %v204 = vcvt.s32.f32 %v200
        %v205 = vcvt.s32.f32 %v201
        %v206 = vcvt.s32.f32 %v202
        %v207 = vld [vmem:[%s3] sm:$0xf]
        %v208 = vlaneseq
        %v209 = vand.u32 %v208, 127
        %210 = vset.pattern.permute.xlu0 0
        %211 = vperm.xlu0 %210, %v199
        %v212 = vpop.permute.xlu0 %211
        %213 = vset.pattern.permute.xlu0 0
        %214 = vperm.xlu0 %213, %v200
        %v215 = vpop.permute.xlu0 %214
        %216 = vset.pattern.permute.xlu0 0
        %217 = vperm.xlu0 %216, %v201
        %v218 = vpop.permute.xlu0 %217
        %219 = vset.pattern.permute.xlu0 0
        %220 = vperm.xlu0 %219, %v202
        %v221 = vpop.permute.xlu0 %220
        %vm222 = vcmp.eq.s32.totalorder %v209, %v212
        %vm223 = vcmp.eq.s32.totalorder %v209, %v215
        %vm224 = vcmp.eq.s32.totalorder %v209, %v218
        %vm225 = vcmp.eq.s32.totalorder %v209, %v221
        %v226 = vsel %vm222, 1, 0
        %v227 = vsel %vm223, 1, 0
        %v228 = vsel %vm224, 1, 0
        %v229 = vsel %vm225, 1, 0
        %v230 = vcvt.s32.f32 %v226
        %v231 = vcvt.s32.f32 %v227
        %v232 = vcvt.s32.f32 %v228
        %v233 = vcvt.s32.f32 %v229
        %v234 = vld [vmem:[%s1] sm:$0xff]
        %v235 = vld [vmem:[%s1 + $0x8] sm:$0xff]
        %v236 = vld [vmem:[%s1 + $0x10] sm:$0xff]
        %v237 = vlaneseq
        %v238 = vshrl.u32 %v237, 7
        %v239 = vsub.s32 0, %v238
        %v240 = vrot.slane %v207, %v239
        %vm241 = vcmask 195584
        %v243 = vsel %vm241, %v230, 0
        %v246 = vsel %vm241, %v231, 0
        %v249 = vsel %vm241, %v232, 0
        %v252 = vsel %vm241, %v233, 0
        %254 = vmatprep.subr.mxu0 0.0
        %255 = vmatpush1.msra.mxu0 %v234
        %256 = vmatprep.subr.mxu0 0.0
        %257 = vmatpush1.msra.mxu0 %v235
        %258 = vmatprep.subr.mxu0 0.0
        %259 = vmatpush1.msra.mxu0 %v236
        %260 = vmatprep.subr.mxu0 0.0
        %261 = vmatpush1.msra.mxu0 0.0
        %262 = vmatprep.subr.mxu0 0.0
        %263 = vmatpush1.msra.mxu0 0.0
        %264 = vmatprep.subr.mxu0 0.0
        %265 = vmatpush1.msra.mxu0 0.0
        %266 = vmatprep.subr.mxu0 0.0
        %267 = vmatpush1.msra.mxu0 0.0
        %268 = vmatprep.subr.mxu0 0.0
        %269 = vmatpush1.msra.mxu0 0.0
        %270 = vmatprep.subr.mxu0 0.0
        %271 = vmatpush1.msra.mxu0 0.0
        %272 = vmatprep.subr.mxu0 0.0
        %273 = vmatpush1.msra.mxu0 0.0
        %274 = vmatprep.subr.mxu0 0.0
        %275 = vmatpush1.msra.mxu0 0.0
        %276 = vmatprep.subr.mxu0 0.0
        %277 = vmatpush1.msra.mxu0 0.0
        %278 = vmatprep.subr.mxu0 0.0
        %279 = vmatpush1.msra.mxu0 0.0
        %280 = vmatprep.subr.mxu0 0.0
        %281 = vmatpush1.msra.mxu0 0.0
        %282 = vmatprep.subr.mxu0 0.0
        %283 = vmatpush1.msra.mxu0 0.0
        %284 = vmatprep.subr.mxu0 0.0
        %285 = vmatpush1.msra.mxu0 0.0
        %286 = vmatprep.subr.mxu0 0.0
        %287 = vmatpush1.msra.mxu0 0.0
        %288 = vmatprep.subr.mxu0 0.0
        %289 = vmatpush1.msra.mxu0 0.0
        %290 = vmatprep.subr.mxu0 0.0
        %291 = vmatpush1.msra.mxu0 0.0
        %292 = vmatprep.subr.mxu0 0.0
        %293 = vmatpush1.msra.mxu0 0.0
        %294 = vmatprep.subr.mxu0 0.0
        %295 = vmatpush1.msra.mxu0 0.0
        %296 = vmatprep.subr.mxu0 0.0
        %297 = vmatpush1.msra.mxu0 0.0
        %298 = vmatprep.subr.mxu0 0.0
        %299 = vmatpush1.msra.mxu0 0.0
        %300 = vmatprep.subr.mxu0 0.0
        %301 = vmatpush1.msra.mxu0 0.0
        %302 = vmatprep.subr.mxu0 0.0
        %303 = vmatpush1.msra.mxu0 0.0
        %304 = vmatprep.subr.mxu0 0.0
        %305 = vmatpush1.msra.mxu0 0.0
        %306 = vmatprep.subr.mxu0 0.0
        %307 = vmatpush1.msra.mxu0 0.0
        %308 = vmatprep.subr.mxu0 0.0
        %309 = vmatpush1.msra.mxu0 0.0
        %310 = vmatprep.subr.mxu0 0.0
        %311 = vmatpush1.msra.mxu0 0.0
        %312 = vmatprep.subr.mxu0 0.0
        %313 = vmatpush1.msra.mxu0 0.0
        %314 = vmatprep.subr.mxu0 0.0
        %315 = vmatpush1.msra.mxu0 0.0
        %316 = vmatprep.subr.mxu0 0.0
        %317 = vmatpush1.msra.mxu0 0.0
        %318 = vmatprep.mubr.f32.mxu0 0.0
        %319 = vmatmul.mubr.f32.gmra.mrb[0].mxu0 %v243
        %v320 = vpop.f32.mrb[0].mxu0
        %v321 = vadd.f32 %v240, %v320
        %v322 = vpop.f32.mrb[0].mxu0
        %323 = vmatprep.mubr.f32.mxu0 0.0
        %324 = vmatmul.mubr.f32.gmra.mrb[0].mxu0 %v246
        %v325 = vpop.f32.mrb[0].mxu0
        %v326 = vadd.f32 %v240, %v325
        %v327 = vpop.f32.mrb[0].mxu0
        %328 = vmatprep.mubr.f32.mxu0 0.0
        %329 = vmatmul.mubr.f32.gmra.mrb[0].mxu0 %v249
        %v330 = vpop.f32.mrb[0].mxu0
        %v331 = vadd.f32 %v240, %v330
        %v332 = vpop.f32.mrb[0].mxu0
        %333 = vmatprep.mubr.f32.mxu0 0.0
        %334 = vmatmul.mubr.f32.gmra.mrb[0].mxu0 %v252
        %v335 = vpop.f32.mrb[0].mxu0
        %v336 = vadd.f32 %v240, %v335
        %v337 = vpop.f32.mrb[0].mxu0
        %338 = vdwg.mxu0
        %340 = vset.pattern.permute.xlu0 1
        %341 = vperm.xlu0 %340, %v203
        %v342 = vpop.permute.xlu0 %341
        %345 = vset.pattern.permute.xlu0 1
        %346 = vperm.xlu0 %345, %v204
        %v347 = vpop.permute.xlu0 %346
        %350 = vset.pattern.permute.xlu0 1
        %351 = vperm.xlu0 %350, %v205
        %v352 = vpop.permute.xlu0 %351
        %355 = vset.pattern.permute.xlu0 1
        %356 = vperm.xlu0 %355, %v206
        %v357 = vpop.permute.xlu0 %356
        %v359 = vlaneseq
        %v360 = vshrl.u32 %v359, 7
        %v361 = vsub.s32 1, %v360
        %v362 = vrot.slane %v207, %v361
        %v363 = vmul.f32 %v342, %v362
        %v364 = vmul.f32 %v347, %v362
        %v365 = vmul.f32 %v352, %v362
        %v366 = vmul.f32 %v357, %v362
        %v367 = vadd.f32 %v321, %v363
        %v368 = vadd.f32 %v326, %v364
        %v369 = vadd.f32 %v331, %v365
        %v370 = vadd.f32 %v336, %v366
        %v371 = vld [vmem:[%s2] sm:$0xff]
        %v372 = vld [vmem:[%s2 + $0x8] sm:$0xff]
        %v373 = vadd.f32 %v367, %v371
        %v374 = vadd.f32 %v368, %v372
        %v375 = vadd.f32 %v369, %v371
        %v376 = vadd.f32 %v370, %v372
        %377 = vadd.xlane.f32.xlu0 %v373
        %v378 = vpop.xlane.xlu0 %377
        %379 = vadd.xlane.f32.xlu0 %v374
        %v380 = vpop.xlane.xlu0 %379
        %381 = vadd.xlane.f32.xlu0 %v375
        %v382 = vpop.xlane.xlu0 %381
        %383 = vadd.xlane.f32.xlu0 %v376
        %v384 = vpop.xlane.xlu0 %383
        %v385 = vmul.f32 %v378, 0.0078125
        %v386 = vmul.f32 %v380, 0.0078125
        %v387 = vmul.f32 %v382, 0.0078125
        %v388 = vmul.f32 %v384, 0.0078125
        %v389 = vmul.f32 %v373, %v373
        %v390 = vmul.f32 %v374, %v374
        %v391 = vmul.f32 %v375, %v375
        %v392 = vmul.f32 %v376, %v376
        %393 = vadd.xlane.f32.xlu0 %v389
        %v394 = vpop.xlane.xlu0 %393
        %395 = vadd.xlane.f32.xlu0 %v390
        %v396 = vpop.xlane.xlu0 %395
        %397 = vadd.xlane.f32.xlu0 %v391
        %v398 = vpop.xlane.xlu0 %397
        %399 = vadd.xlane.f32.xlu0 %v392
        %v400 = vpop.xlane.xlu0 %399
        %v401 = vmul.f32 %v394, 0.0078125
        %v402 = vmul.f32 %v396, 0.0078125
        %v403 = vmul.f32 %v398, 0.0078125
        %v404 = vmul.f32 %v400, 0.0078125
        %v405 = vmul.f32 %v385, %v385
        %v406 = vmul.f32 %v386, %v386
        %v407 = vmul.f32 %v387, %v387
        %v408 = vmul.f32 %v388, %v388
        %v409 = vsub.f32 %v401, %v405
        %v410 = vsub.f32 %v402, %v406
        %v411 = vsub.f32 %v403, %v407
        %v412 = vsub.f32 %v404, %v408
        %v413 = vsub.f32 %v373, %v385
        %v414 = vsub.f32 %v374, %v386
        %v415 = vsub.f32 %v375, %v387
        %v416 = vsub.f32 %v376, %v388
        %v417 = vadd.f32 %v409, 1e-05
        %v418 = vadd.f32 %v410, 1e-05
        %v419 = vadd.f32 %v411, 1e-05
        %v420 = vadd.f32 %v412, 1e-05
        %v421 = vrsqrt.pop %v417
        %v422 = vrsqrt.pop %v418
        %v423 = vrsqrt.pop %v419
        %v424 = vrsqrt.pop %v420
        %v425 = vmul.f32 %v413, %v421
        %v426 = vmul.f32 %v414, %v422
        %v427 = vmul.f32 %v415, %v423
        %v428 = vmul.f32 %v416, %v424
        %v429 = vlaneseq
        %v430 = vshrl.u32 %v429, 7
        %v431 = vsub.s32 2, %v430
        %v432 = vrot.slane %v207, %v431
        %v433 = vmul.f32 %v425, %v432
        %v434 = vmul.f32 %v426, %v432
        %v435 = vmul.f32 %v427, %v432
        %v436 = vmul.f32 %v428, %v432
        %v437 = vlaneseq
        %v438 = vshrl.u32 %v437, 7
        %v439 = vsub.s32 3, %v438
        %v440 = vrot.slane %v207, %v439
        %v441 = vadd.f32 %v433, %v440
        %v442 = vadd.f32 %v434, %v440
        %v443 = vadd.f32 %v435, %v440
        %v444 = vadd.f32 %v436, %v440
        %445 = vst [vmem:[%s191] sm:$0xff] %v441
        %446 = vst [vmem:[%s191 + $0x8] sm:$0xff] %v442
        %447 = vst [vmem:[%s191 + $0x10] sm:$0xff] %v443
        %448 = vst [vmem:[%s191 + $0x18] sm:$0xff] %v444
        %s449 = sand.u32 %s115, 1
        %s450 = scalar_lea.sflag [#allocation3], %s449
        %s451 = sand.u32 %s115, 1
        %s452 = smul.addr %s451, 32
        %s453 = scalar_lea.vmem [#allocation2], %s452
        // Predicated region
        $region37: #{tpu_custom_call.1} parent=35 // pred_check
          %p454 = pneg %p125
        $region38: #{tpu_custom_call.1} parent=35 // pred_check_branch
          %456 = sbr.rel (%p454) target = $region40
        $region39: #{tpu_custom_call.1} parent=35 // pred_region
          %s457 = smul.u32 2, %s18
          %s459 = ssub.s32 512, 512
          %460 = vsyncadd %s450, %s459
          %s461 = smul.addr %s457, 2
          %s462 = smul.addr %s461, 128
          %s463 = scalar_lea.hbm %s4, %s462
          %s464 = sshll.u32 %s453, 4
          %s465 = int_to_ptr.vmem [resolvable:$true] %s464
          %470 = dma.vmem_to_hbm [thread:$0]  %s465, 512, %s463, %s450, 128, 128, 8
        $region40: #{tpu_custom_call.1} parent=35 // pred_fallthru
          _
      $region36: #{tpu_custom_call.1} parent=5 // pred_fallthru
        _
      %p471 = scmp.le.s32.totalorder 2, %s13
      // Predicated region
      $region41: #{tpu_custom_call.1} parent=5 // pred_check
        %p472 = pneg %p471
      $region42: #{tpu_custom_call.1} parent=5 // pred_check_branch
        %474 = sbr.rel (%p472) target = $region44
      $region43: #{tpu_custom_call.1} parent=5 // pred_region
        %s475 = ssub.s32 %s13, 2
        // Predicated region
        $region45: #{tpu_custom_call.1} parent=43 // pred_check
          %p476 = pneg %p131
        $region46: #{tpu_custom_call.1} parent=43 // pred_check_branch
          %478 = sbr.rel (%p476) target = $region48
        $region47: #{tpu_custom_call.1} parent=43 // pred_region
          %s479 = sand.u32 %s116, 1
          %s480 = scalar_lea.sflag [#allocation3], %s479
          %s481 = sand.u32 %s116, 1
          %s482 = smul.addr %s481, 32
          %s483 = scalar_lea.vmem [#allocation2], %s482
          %484 = dma.done %s480, 512
        $region48: #{tpu_custom_call.1} parent=43 // pred_fallthru
          _
      $region44: #{tpu_custom_call.1} parent=5 // pred_fallthru
        _
    $region6: #{tpu_custom_call.1} parent=1 // loop_footer
      %s17 = sadd.s32 1, %s13
    $region7: #{tpu_custom_call.1} parent=1 // loop_footer_branch
      %12 = sbr.rel target = $region3
    $region8: #{tpu_custom_call.1} parent=1 // loop_exit
      _
    %485 = vsyncpa [#allocation3], 1
    %s486 = scalar_lea.sflag [#allocation3], 1
    %487 = vsyncpa %s486, 1

</llo_original>
